<compile_context>
chip_gen: v6e
topology: v6e:2x2x1
jax: 0.10.0
libtpu: 0.0.40
codegen_flags: <defaults>
</compile_context>

<pallas_src>
import functools

import jax
import jax.numpy as jnp
from jax import lax
from jax.experimental import pallas as pl
from jax.experimental.pallas import tpu as pltpu  # noqa: F401  (TPU backend)

# Model hyper-parameters (module-level constants in the original script).
N_EMBED = 32      # C
HEAD_SIZE = 16    # H
DROPOUT = 0.1     # TODO(synk): training-mode dropout on attention weights not
                  # applied (kernel implements eval semantics: identity).

LANE = 128        # lane width; V/output padded to this for unmasked stores


def _head_kernel(x_ref, w_ref, o_ref, *, B, T, H, Hp, scale):
    # x_ref: (B*T, C)          -- all batches flattened
    # w_ref: (C, Hp + 2H)      -- [Wv (zero-padded to Hp) | Wk | Wq]
    # o_ref: (B, T, Hp)        -- lane-dense output (cols >= H are zeros)
    x = x_ref[...]

    # One fused projection for all batches: (B*T, C) @ (C, Hp+2H).
    proj = jnp.dot(x, w_ref[...], preferred_element_type=jnp.float32)

    for b in range(B):  # B is tiny & static -> fully unrolled
        blk = proj[b * T:(b + 1) * T]            # (T, Hp + 2H)
        v = blk[:, :Hp]                          # (T, Hp), cols >= H are zero
        k = blk[:, Hp:Hp + H]                    # (T, H)
        q = blk[:, Hp + H:Hp + 2 * H]            # (T, H)

        # wei = q @ k^T * C**-0.5   (contract on H, no explicit transpose)
        wei = lax.dot_general(
            q, k,
            dimension_numbers=(((1,), (1,)), ((), ())),
            preferred_element_type=jnp.float32) * scale        # (T, T)

        # Numerically-stable softmax over the last axis (f32 throughout).
        wei = wei - jnp.max(wei, axis=-1, keepdims=True)
        wei = jnp.exp(wei)
        wei = wei * pl.reciprocal(
            jnp.sum(wei, axis=-1, keepdims=True), approx=True)

        # dropout(wei): identity in eval mode.

        out = jnp.dot(wei, v, preferred_element_type=jnp.float32)  # (T, Hp)
        o_ref[b] = out.astype(o_ref.dtype)


def head_forward(x, wk, wq, wv):
    """x: (B, T, C) f32; wk/wq/wv: (C, H) f32 -> (B, T, H)."""
    B, T, C = x.shape
    H = wk.shape[1]
    Hp = LANE  # pad the value/output head dim to a full 128-lane vreg

    # Fuse the three projections; zero-pad Wv so the PV matmul directly
    # produces a lane-dense (T, 128) tile (padding columns are exactly zero).
    wv_padded = jnp.zeros((C, Hp), wv.dtype).at[:, :H].set(wv)
    w_fused = jnp.concatenate([wv_padded, wk, wq], axis=1)   # (C, Hp + 2H)

    x2d = x.reshape(B * T, C)                                # free reshape

    kernel = functools.partial(
        _head_kernel, B=B, T=T, H=H, Hp=Hp, scale=C ** -0.5)

    out_padded = pl.pallas_call(
        kernel,
        out_shape=jax.ShapeDtypeStruct((B, T, Hp), x.dtype),
        # No grid: single invocation, whole arrays resident in VMEM.
    )(x2d, w_fused)

    return out_padded[:, :, :H]


def head_reference(x, wk, wq, wv):
    """Pure-JAX reference matching the PyTorch forward (eval mode)."""
    C = x.shape[-1]
    k = x @ wk
    q = x @ wq
    v = x @ wv
    wei = (q @ jnp.swapaxes(k, -2, -1)) * (C ** -0.5)
    wei = jax.nn.softmax(wei, axis=-1)
    return wei @ v


if __name__ == "__main__":
    key = jax.random.PRNGKey(0)
    kx, kk, kq, kv = jax.random.split(key, 4)

    B, T, C, H = 2, 8, N_EMBED, HEAD_SIZE

    x = jax.random.normal(kx, (B, T, C), dtype=jnp.float32)
    # Deterministic param init; weights stored as (C, H) so x @ W matches
    # nn.Linear(n_embed, head_size, bias=False) (PyTorch applies x @ W.T).
    scale = 1.0 / jnp.sqrt(C)
    wk = jax.random.uniform(kk, (C, H), jnp.float32, -scale, scale)
    wq = jax.random.uniform(kq, (C, H), jnp.float32, -scale, scale)
    wv = jax.random.uniform(kv, (C, H), jnp.float32, -scale, scale)

    out = head_forward(x, wk, wq, wv)
    jax.block_until_ready(out)

    ref = head_reference(x, wk, wq, wv)
    assert out.shape == (B, T, H)
    # Tolerance loosened to 2e-3 for the approximate (EUP) reciprocal.
    assert jnp.allclose(out, ref, atol=2e-3, rtol=2e-3), "mismatch vs reference"

    print("KERNEL_OK")
</pallas_src>

<mosaic_0001>
module attributes {stable_mosaic.version = 11 : i64} {
  func.func @_head_kernel(%arg0: memref<16x32xf32, #tpu.memory_space<vmem>>, %arg1: memref<32x160xf32, #tpu.memory_space<vmem>>, %arg2: memref<2x8x128xf32, #tpu.memory_space<vmem>>) attributes {dimension_semantics = [], scalar_prefetch = 0 : i64, scratch_operands = 0 : i64, tpu.core_type = #tpu.core_type<tc>} {
    %c0 = arith.constant 0 : index
    %c0_0 = arith.constant 0 : index
    %0 = vector.load %arg0[%c0, %c0_0] : memref<16x32xf32, #tpu.memory_space<vmem>>, vector<16x32xf32>
    %c0_1 = arith.constant 0 : index
    %c0_2 = arith.constant 0 : index
    %1 = vector.load %arg1[%c0_1, %c0_2] : memref<32x160xf32, #tpu.memory_space<vmem>>, vector<32x160xf32>
    %cst = arith.constant dense<0.000000e+00> : vector<16x160xf32>
    %2 = tpu.matmul %0, %1, %cst {dimension_numbers = #tpu.dot_dimension_numbers<[1], [0], [0], [1], [0, 0, 1, 1], [], []>} : vector<16x32xf32>, vector<32x160xf32>, vector<16x160xf32> -> vector<16x160xf32>
    %3 = vector.extract_strided_slice %2 {offsets = [0, 0], sizes = [8, 160], strides = [1, 1]} : vector<16x160xf32> to vector<8x160xf32>
    %4 = vector.extract_strided_slice %3 {offsets = [0, 0], sizes = [8, 128], strides = [1, 1]} : vector<8x160xf32> to vector<8x128xf32>
    %5 = vector.extract_strided_slice %3 {offsets = [0, 128], sizes = [8, 16], strides = [1, 1]} : vector<8x160xf32> to vector<8x16xf32>
    %6 = vector.extract_strided_slice %3 {offsets = [0, 144], sizes = [8, 16], strides = [1, 1]} : vector<8x160xf32> to vector<8x16xf32>
    %cst_3 = arith.constant dense<0.000000e+00> : vector<8x8xf32>
    %7 = tpu.matmul %6, %5, %cst_3 {dimension_numbers = #tpu.dot_dimension_numbers<[1], [1], [0], [0], [0, 0, 1, 0], [], []>} : vector<8x16xf32>, vector<8x16xf32>, vector<8x8xf32> -> vector<8x8xf32>
    %cst_4 = arith.constant 0.176776692 : f32
    %8 = vector.broadcast %cst_4 : f32 to vector<8x8xf32>
    %9 = arith.mulf %7, %8 : vector<8x8xf32>
    %cst_5 = arith.constant dense<0xFF800000> : vector<8xf32>
    %10 = vector.multi_reduction <maximumf>, %9, %cst_5 [1] : vector<8x8xf32> to vector<8xf32>
    %11 = vector.shape_cast %10 : vector<8xf32> to vector<8x1xf32>
    %12 = vector.broadcast %11 : vector<8x1xf32> to vector<8x8xf32>
    %13 = arith.subf %9, %12 : vector<8x8xf32>
    %14 = math.exp %13 : vector<8x8xf32>
    %cst_6 = arith.constant dense<0.000000e+00> : vector<8xf32>
    %15 = vector.multi_reduction <add>, %14, %cst_6 [1] : vector<8x8xf32> to vector<8xf32>
    %16 = vector.shape_cast %15 : vector<8xf32> to vector<8x1xf32>
    %17 = tpu.reciprocal %16 {approx = true} : vector<8x1xf32> -> vector<8x1xf32>
    %18 = vector.broadcast %17 : vector<8x1xf32> to vector<8x8xf32>
    %19 = arith.mulf %14, %18 : vector<8x8xf32>
    %cst_7 = arith.constant dense<0.000000e+00> : vector<8x128xf32>
    %20 = tpu.matmul %19, %4, %cst_7 {dimension_numbers = #tpu.dot_dimension_numbers<[1], [0], [0], [1], [0, 0, 1, 1], [], []>} : vector<8x8xf32>, vector<8x128xf32>, vector<8x128xf32> -> vector<8x128xf32>
    %c0_8 = arith.constant 0 : index
    %c0_9 = arith.constant 0 : index
    %c0_10 = arith.constant 0 : index
    %21 = vector.load %arg2[%c0_8, %c0_9, %c0_10] : memref<2x8x128xf32, #tpu.memory_space<vmem>>, vector<1x8x128xf32>
    %22 = vector.shape_cast %21 : vector<1x8x128xf32> to vector<8x128xf32>
    %23 = vector.shape_cast %20 : vector<8x128xf32> to vector<1x8x128xf32>
    tpu.vector_store %arg2[%c0_8, %c0_9, %c0_10], %23 {strides = array<i32>} : memref<2x8x128xf32, #tpu.memory_space<vmem>>, vector<1x8x128xf32>,
    %24 = vector.extract_strided_slice %2 {offsets = [8, 0], sizes = [8, 160], strides = [1, 1]} : vector<16x160xf32> to vector<8x160xf32>
    %25 = vector.extract_strided_slice %24 {offsets = [0, 0], sizes = [8, 128], strides = [1, 1]} : vector<8x160xf32> to vector<8x128xf32>
    %26 = vector.extract_strided_slice %24 {offsets = [0, 128], sizes = [8, 16], strides = [1, 1]} : vector<8x160xf32> to vector<8x16xf32>
    %27 = vector.extract_strided_slice %24 {offsets = [0, 144], sizes = [8, 16], strides = [1, 1]} : vector<8x160xf32> to vector<8x16xf32>
    %cst_11 = arith.constant dense<0.000000e+00> : vector<8x8xf32>
    %28 = tpu.matmul %27, %26, %cst_11 {dimension_numbers = #tpu.dot_dimension_numbers<[1], [1], [0], [0], [0, 0, 1, 0], [], []>} : vector<8x16xf32>, vector<8x16xf32>, vector<8x8xf32> -> vector<8x8xf32>
    %cst_12 = arith.constant 0.176776692 : f32
    %29 = vector.broadcast %cst_12 : f32 to vector<8x8xf32>
    %30 = arith.mulf %28, %29 : vector<8x8xf32>
    %cst_13 = arith.constant dense<0xFF800000> : vector<8xf32>
    %31 = vector.multi_reduction <maximumf>, %30, %cst_13 [1] : vector<8x8xf32> to vector<8xf32>
    %32 = vector.shape_cast %31 : vector<8xf32> to vector<8x1xf32>
    %33 = vector.broadcast %32 : vector<8x1xf32> to vector<8x8xf32>
    %34 = arith.subf %30, %33 : vector<8x8xf32>
    %35 = math.exp %34 : vector<8x8xf32>
    %cst_14 = arith.constant dense<0.000000e+00> : vector<8xf32>
    %36 = vector.multi_reduction <add>, %35, %cst_14 [1] : vector<8x8xf32> to vector<8xf32>
    %37 = vector.shape_cast %36 : vector<8xf32> to vector<8x1xf32>
    %38 = tpu.reciprocal %37 {approx = true} : vector<8x1xf32> -> vector<8x1xf32>
    %39 = vector.broadcast %38 : vector<8x1xf32> to vector<8x8xf32>
    %40 = arith.mulf %35, %39 : vector<8x8xf32>
    %cst_15 = arith.constant dense<0.000000e+00> : vector<8x128xf32>
    %41 = tpu.matmul %40, %25, %cst_15 {dimension_numbers = #tpu.dot_dimension_numbers<[1], [0], [0], [1], [0, 0, 1, 1], [], []>} : vector<8x8xf32>, vector<8x128xf32>, vector<8x128xf32> -> vector<8x128xf32>
    %c1 = arith.constant 1 : index
    %c0_16 = arith.constant 0 : index
    %c0_17 = arith.constant 0 : index
    %42 = vector.load %arg2[%c1, %c0_16, %c0_17] : memref<2x8x128xf32, #tpu.memory_space<vmem>>, vector<1x8x128xf32>
    %43 = vector.shape_cast %42 : vector<1x8x128xf32> to vector<8x128xf32>
    %44 = vector.shape_cast %41 : vector<8x128xf32> to vector<1x8x128xf32>
    tpu.vector_store %arg2[%c1, %c0_16, %c0_17], %44 {strides = array<i32>} : memref<2x8x128xf32, #tpu.memory_space<vmem>>, vector<1x8x128xf32>,
    return
  }
}

</mosaic_0001>

<llo_original>
// kernel: tpu_custom_call.1
$region0: #{tpu_custom_call.1}
  #allocation0 [shape = 'u32[]', space=smem, size = 0x4, offset = 0x4, fixed_abs, tag = 'smem constant byte address 0x4 - core index']
  #allocation1 [shape = 'u32[144,128]{1,0:T(1,128)}', space=vmem, size = 0x12000, scoped, tag = 'internal scratch']
  %s0 = inlined_call_operand.hbm [shape: f32[16,32], index: 0, kind: input, shape index: {}]
  %s1 = inlined_call_operand.hbm [shape: f32[32,160], index: 1, kind: input, shape index: {}]
  %s2 = inlined_call_operand.hbm [shape: f32[2,8,128], index: 2, kind: output, shape index: {}]
  %s3 = sld [smem:[#allocation0]]
  $region26: #{tpu_custom_call.1} parent=0
    _
  %s5 = ssub.s32 1, %s3
  %s6 = scalar_select 0, %s5, %s3
  $region1: #{tpu_custom_call.1} parent=0
    #allocation2 [shape = 'u8[8192]{0}', space=vmem, size = 0x2000, scoped, tag = 'input window, operand 0, single buffered']
    #allocation3 [shape = 's32[1]{0}', space=sflag, size = 0x4, scoped, tag = 'scoped memory for tpu_custom_call.1']
    #allocation4 [shape = 's32[1]{0}', space=sflag, size = 0x4, scoped, tag = 'scoped memory for tpu_custom_call.1']
    #allocation5 [shape = 'u8[32768]{0}', space=vmem, size = 0x8000, scoped, tag = 'input window, operand 1, single buffered']
    #allocation6 [shape = 's32[1]{0}', space=sflag, size = 0x4, scoped, tag = 'scoped memory for tpu_custom_call.1']
    #allocation7 [shape = 'u8[8192]{0}', space=vmem, size = 0x2000, scoped, tag = 'output window, operand 0, single buffered']
    %7 = vsyncpa [#allocation3], 0
    %8 = vsyncpa [#allocation6], 0
    %9 = vsyncpa [#allocation4], 0
    // Predicated region
    $region2: #{tpu_custom_call.1} parent=1 // pred_check
      _
    $region3: #{tpu_custom_call.1} parent=1 // pred_check_branch
      %11 = sbr.rel (0) target = $region5
    $region4: #{tpu_custom_call.1} parent=1 // pred_region
      %s13 = ssub.s32 256, 256
      %14 = vsyncadd [#allocation3], %s13
      %s15 = sshll.u32 [#allocation2], 4
      %s16 = int_to_ptr.vmem [resolvable:$true] %s15
      %21 = dma.hbm_to_vmem [thread:$0]  %s0, 256, %s16, [#allocation3], 128, 128, 8
    $region5: #{tpu_custom_call.1} parent=1 // pred_fallthru
      _
    // Predicated region
    $region6: #{tpu_custom_call.1} parent=1 // pred_check
      _
    $region7: #{tpu_custom_call.1} parent=1 // pred_check_branch
      %23 = sbr.rel (0) target = $region9
    $region8: #{tpu_custom_call.1} parent=1 // pred_region
      %s25 = ssub.s32 1024, 1024
      %26 = vsyncadd [#allocation6], %s25
      %s27 = sshll.u32 [#allocation5], 4
      %s28 = int_to_ptr.vmem [resolvable:$true] %s27
      %33 = dma.hbm_to_vmem [thread:$0]  %s1, 1024, %s28, [#allocation6], 256, 256, 16
    $region9: #{tpu_custom_call.1} parent=1 // pred_fallthru
      _
    // Predicated region
    $region10: #{tpu_custom_call.1} parent=1 // pred_check
      _
    $region11: #{tpu_custom_call.1} parent=1 // pred_check_branch
      %35 = sbr.rel (0) target = $region13
    $region12: #{tpu_custom_call.1} parent=1 // pred_region
      %36 = dma.done [#allocation3], 256
    $region13: #{tpu_custom_call.1} parent=1 // pred_fallthru
      _
    // Predicated region
    $region14: #{tpu_custom_call.1} parent=1 // pred_check
      _
    $region15: #{tpu_custom_call.1} parent=1 // pred_check_branch
      %38 = sbr.rel (0) target = $region17
    $region16: #{tpu_custom_call.1} parent=1 // pred_region
      %39 = dma.done [#allocation6], 1024
    $region17: #{tpu_custom_call.1} parent=1 // pred_fallthru
      _
    %v40 = vld [vmem:[#allocation2] sm:$0xff]
    %v41 = vld [vmem:[#allocation2 + $0x8] sm:$0xff]
    %v42 = vld [vmem:[#allocation5] sm:$0xff]
    %v43 = vld [vmem:[#allocation5 + $0x8] sm:$0xff]
    %v44 = vld [vmem:[#allocation5 + $0x10] sm:$0xff]
    %v45 = vld [vmem:[#allocation5 + $0x18] sm:$0xff]
    %v46 = vld [vmem:[#allocation5 + $0x20] sm:$0xff]
    %v47 = vld [vmem:[#allocation5 + $0x28] sm:$0xff]
    %v48 = vld [vmem:[#allocation5 + $0x30] sm:$0xff]
    %v49 = vld [vmem:[#allocation5 + $0x38] sm:$0xff]
    %vm50 = vcmask 261120
    %v52 = vsel %vm50, %v40, 0
    %v55 = vsel %vm50, %v41, 0
    %57 = vmatprep.subr.mxu0 0.0
    %58 = vmatpush1.msra.mxu0 0.0
    %59 = vmatprep.subr.mxu0 0.0
    %60 = vmatpush1.msra.mxu0 0.0
    %61 = vmatprep.subr.mxu0 0.0
    %62 = vmatpush1.msra.mxu0 0.0
    %63 = vmatprep.subr.mxu0 0.0
    %64 = vmatpush1.msra.mxu0 0.0
    %65 = vmatprep.subr.mxu0 0.0
    %66 = vmatpush1.msra.mxu0 0.0
    %67 = vmatprep.subr.mxu0 0.0
    %68 = vmatpush1.msra.mxu0 0.0
    %69 = vmatprep.subr.mxu0 0.0
    %70 = vmatpush1.msra.mxu0 0.0
    %71 = vmatprep.subr.mxu0 0.0
    %72 = vmatpush1.msra.mxu0 0.0
    %73 = vmatprep.subr.mxu0 0.0
    %74 = vmatpush1.msra.mxu0 0.0
    %75 = vmatprep.subr.mxu0 0.0
    %76 = vmatpush1.msra.mxu0 0.0
    %77 = vmatprep.subr.mxu0 0.0
    %78 = vmatpush1.msra.mxu0 0.0
    %79 = vmatprep.subr.mxu0 0.0
    %80 = vmatpush1.msra.mxu0 0.0
    %81 = vmatprep.subr.mxu0 %v49
    %82 = vmatpush1.msra.mxu0 %v48
    %83 = vmatprep.subr.mxu0 %v47
    %84 = vmatpush1.msra.mxu0 %v46
    %85 = vmatprep.subr.mxu0 %v45
    %86 = vmatpush1.msra.mxu0 %v44
    %87 = vmatprep.subr.mxu0 %v43
    %88 = vmatpush1.msra.mxu0 %v42
    %89 = vmatprep.subr.mxu0 0.0
    %90 = vmatpush2.msra.mxu0 0.0
    %91 = vmatprep.subr.mxu0 0.0
    %92 = vmatpush2.msra.mxu0 0.0
    %93 = vmatprep.subr.mxu0 0.0
    %94 = vmatpush2.msra.mxu0 0.0
    %95 = vmatprep.subr.mxu0 0.0
    %96 = vmatpush2.msra.mxu0 0.0
    %97 = vmatprep.subr.mxu0 0.0
    %98 = vmatpush2.msra.mxu0 0.0
    %99 = vmatprep.subr.mxu0 0.0
    %100 = vmatpush2.msra.mxu0 0.0
    %101 = vmatprep.subr.mxu0 0.0
    %102 = vmatpush2.msra.mxu0 0.0
    %103 = vmatprep.subr.mxu0 0.0
    %104 = vmatpush2.msra.mxu0 0.0
    %105 = vmatprep.subr.mxu0 0.0
    %106 = vmatpush2.msra.mxu0 0.0
    %107 = vmatprep.subr.mxu0 0.0
    %108 = vmatpush2.msra.mxu0 0.0
    %109 = vmatprep.subr.mxu0 0.0
    %110 = vmatpush2.msra.mxu0 0.0
    %111 = vmatprep.subr.mxu0 0.0
    %112 = vmatpush2.msra.mxu0 0.0
    %113 = vmatprep.subr.mxu0 0.0
    %114 = vmatpush2.msra.mxu0 0.0
    %115 = vmatprep.subr.mxu0 0.0
    %116 = vmatpush2.msra.mxu0 0.0
    %117 = vmatprep.subr.mxu0 0.0
    %118 = vmatpush2.msra.mxu0 0.0
    %119 = vmatprep.subr.mxu0 0.0
    %120 = vmatpush2.msra.mxu0 0.0
    %121 = vmatprep.mubr.f32.mxu0 0.0
    %122 = vmatmul.mubr.f32.gmra.mxu0 %v52
    %v123 = vpop.f32.mrf.mxu0
    %v124 = vadd.f32 0.0, %v123
    %v125 = vpop.f32.mrf.mxu0
    %v126 = vadd.f32 0.0, %v125
    %127 = vmatprep.mubr.f32.mxu0 0.0
    %128 = vmatmul.mubr.f32.gmra.mxu0 %v55
    %v129 = vpop.f32.mrf.mxu0
    %v130 = vadd.f32 0.0, %v129
    %v131 = vpop.f32.mrf.mxu0
    %v132 = vadd.f32 0.0, %v131
    %133 = vdwg.mxu0
    %135 = vrot.lane.b32.xlu0 %v126, 112
    %v136 = vpop.permute.xlu0 %135
    %vm137 = vcmask 130048
    %v138 = vsel %vm137, %v136, 0
    %v140 = vsel %vm137, %v126, 0
    %142 = vmatprep.subr.mxu0 0.0
    %143 = vmatpush1.xpose.msra.mxu0 0.0
    %144 = vmatprep.subr.mxu0 0.0
    %145 = vmatpush1.xpose.msra.mxu0 0.0
    %146 = vmatprep.subr.mxu0 0.0
    %147 = vmatpush1.xpose.msra.mxu0 0.0
    %148 = vmatprep.subr.mxu0 0.0
    %149 = vmatpush1.xpose.msra.mxu0 0.0
    %150 = vmatprep.subr.mxu0 0.0
    %151 = vmatpush1.xpose.msra.mxu0 0.0
    %152 = vmatprep.subr.mxu0 0.0
    %153 = vmatpush1.xpose.msra.mxu0 0.0
    %154 = vmatprep.subr.mxu0 0.0
    %155 = vmatpush1.xpose.msra.mxu0 0.0
    %156 = vmatprep.subr.mxu0 0.0
    %157 = vmatpush1.xpose.msra.mxu0 0.0
    %158 = vmatprep.subr.mxu0 0.0
    %159 = vmatpush1.xpose.msra.mxu0 0.0
    %160 = vmatprep.subr.mxu0 0.0
    %161 = vmatpush1.xpose.msra.mxu0 0.0
    %162 = vmatprep.subr.mxu0 0.0
    %163 = vmatpush1.xpose.msra.mxu0 0.0
    %164 = vmatprep.subr.mxu0 0.0
    %165 = vmatpush1.xpose.msra.mxu0 0.0
    %166 = vmatprep.subr.mxu0 0.0
    %167 = vmatpush1.xpose.msra.mxu0 0.0
    %168 = vmatprep.subr.mxu0 0.0
    %169 = vmatpush1.xpose.msra.mxu0 0.0
    %170 = vmatprep.subr.mxu0 0.0
    %171 = vmatpush1.xpose.msra.mxu0 0.0
    %172 = vmatprep.subr.mxu0 0.0
    %173 = vmatpush1.xpose.msra.mxu0 %v140
    %174 = vmatprep.subr.mxu0 0.0
    %175 = vmatpush2.xpose.msra.mxu0 0.0
    %176 = vmatprep.subr.mxu0 0.0
    %177 = vmatpush2.xpose.msra.mxu0 0.0
    %178 = vmatprep.subr.mxu0 0.0
    %179 = vmatpush2.xpose.msra.mxu0 0.0
    %180 = vmatprep.subr.mxu0 0.0
    %181 = vmatpush2.xpose.msra.mxu0 0.0
    %182 = vmatprep.subr.mxu0 0.0
    %183 = vmatpush2.xpose.msra.mxu0 0.0
    %184 = vmatprep.subr.mxu0 0.0
    %185 = vmatpush2.xpose.msra.mxu0 0.0
    %186 = vmatprep.subr.mxu0 0.0
    %187 = vmatpush2.xpose.msra.mxu0 0.0
    %188 = vmatprep.subr.mxu0 0.0
    %189 = vmatpush2.xpose.msra.mxu0 0.0
    %190 = vmatprep.subr.mxu0 0.0
    %191 = vmatpush2.xpose.msra.mxu0 0.0
    %192 = vmatprep.subr.mxu0 0.0
    %193 = vmatpush2.xpose.msra.mxu0 0.0
    %194 = vmatprep.subr.mxu0 0.0
    %195 = vmatpush2.xpose.msra.mxu0 0.0
    %196 = vmatprep.subr.mxu0 0.0
    %197 = vmatpush2.xpose.msra.mxu0 0.0
    %198 = vmatprep.subr.mxu0 0.0
    %199 = vmatpush2.xpose.msra.mxu0 0.0
    %200 = vmatprep.subr.mxu0 0.0
    %201 = vmatpush2.xpose.msra.mxu0 0.0
    %202 = vmatprep.subr.mxu0 0.0
    %203 = vmatpush2.xpose.msra.mxu0 0.0
    %204 = vmatprep.subr.mxu0 0.0
    %205 = vmatpush2.xpose.msra.mxu0 0.0
    %206 = vmatprep.mubr.f32.mxu0 0.0
    %207 = vmatmul.mubr.f32.gmra.mxu0 %v138
    %v208 = vpop.f32.mrf.mxu0
    %v209 = vadd.f32 0.0, %v208
    %v210 = vpop.f32.mrf.mxu0
    %211 = vdwg.mxu0
    %v212 = vmul.f32 %v209, 0.17677669
    %vm213 = vcmask 64512
    %v214 = vsel %vm213, %v212, -inf
    %215 = vmax.xlane.f32.xlu0 %v214
    %v216 = vpop.xlane.xlu0 %215
    %v217 = vsub.f32 %v212, %v216
    %v218 = vmul.f32 %v217, 1.442695
    %v219 = vpow.pop %v218
    %v220 = vsel %vm213, %v219, 0.0
    %221 = vadd.xlane.f32.xlu0 %v220
    %v222 = vpop.xlane.xlu0 %221
    %v223 = vrcp.pop %v222
    %v224 = vmul.f32 %v219, %v223
    %v226 = vsel %vm213, %v224, 0
    %228 = vmatprep.subr.mxu0 0.0
    %229 = vmatpush1.msra.mxu0 0.0
    %230 = vmatprep.subr.mxu0 0.0
    %231 = vmatpush1.msra.mxu0 0.0
    %232 = vmatprep.subr.mxu0 0.0
    %233 = vmatpush1.msra.mxu0 0.0
    %234 = vmatprep.subr.mxu0 0.0
    %235 = vmatpush1.msra.mxu0 0.0
    %236 = vmatprep.subr.mxu0 0.0
    %237 = vmatpush1.msra.mxu0 0.0
    %238 = vmatprep.subr.mxu0 0.0
    %239 = vmatpush1.msra.mxu0 0.0
    %240 = vmatprep.subr.mxu0 0.0
    %241 = vmatpush1.msra.mxu0 0.0
    %242 = vmatprep.subr.mxu0 0.0
    %243 = vmatpush1.msra.mxu0 0.0
    %244 = vmatprep.subr.mxu0 0.0
    %245 = vmatpush1.msra.mxu0 0.0
    %246 = vmatprep.subr.mxu0 0.0
    %247 = vmatpush1.msra.mxu0 0.0
    %248 = vmatprep.subr.mxu0 0.0
    %249 = vmatpush1.msra.mxu0 0.0
    %250 = vmatprep.subr.mxu0 0.0
    %251 = vmatpush1.msra.mxu0 0.0
    %252 = vmatprep.subr.mxu0 0.0
    %253 = vmatpush1.msra.mxu0 0.0
    %254 = vmatprep.subr.mxu0 0.0
    %255 = vmatpush1.msra.mxu0 0.0
    %256 = vmatprep.subr.mxu0 0.0
    %257 = vmatpush1.msra.mxu0 0.0
    %258 = vmatprep.subr.mxu0 0.0
    %259 = vmatpush1.msra.mxu0 %v124
    %260 = vmatprep.subr.mxu0 0.0
    %261 = vmatpush2.msra.mxu0 0.0
    %262 = vmatprep.subr.mxu0 0.0
    %263 = vmatpush2.msra.mxu0 0.0
    %264 = vmatprep.subr.mxu0 0.0
    %265 = vmatpush2.msra.mxu0 0.0
    %266 = vmatprep.subr.mxu0 0.0
    %267 = vmatpush2.msra.mxu0 0.0
    %268 = vmatprep.subr.mxu0 0.0
    %269 = vmatpush2.msra.mxu0 0.0
    %270 = vmatprep.subr.mxu0 0.0
    %271 = vmatpush2.msra.mxu0 0.0
    %272 = vmatprep.subr.mxu0 0.0
    %273 = vmatpush2.msra.mxu0 0.0
    %274 = vmatprep.subr.mxu0 0.0
    %275 = vmatpush2.msra.mxu0 0.0
    %276 = vmatprep.subr.mxu0 0.0
    %277 = vmatpush2.msra.mxu0 0.0
    %278 = vmatprep.subr.mxu0 0.0
    %279 = vmatpush2.msra.mxu0 0.0
    %280 = vmatprep.subr.mxu0 0.0
    %281 = vmatpush2.msra.mxu0 0.0
    %282 = vmatprep.subr.mxu0 0.0
    %283 = vmatpush2.msra.mxu0 0.0
    %284 = vmatprep.subr.mxu0 0.0
    %285 = vmatpush2.msra.mxu0 0.0
    %286 = vmatprep.subr.mxu0 0.0
    %287 = vmatpush2.msra.mxu0 0.0
    %288 = vmatprep.subr.mxu0 0.0
    %289 = vmatpush2.msra.mxu0 0.0
    %290 = vmatprep.subr.mxu0 0.0
    %291 = vmatpush2.msra.mxu0 0.0
    %292 = vmatprep.mubr.f32.mxu0 0.0
    %293 = vmatmul.mubr.f32.gmra.mxu0 %v226
    %v294 = vpop.f32.mrf.mxu0
    %v295 = vadd.f32 0.0, %v294
    %v296 = vpop.f32.mrf.mxu0
    %297 = vdwg.mxu0
    %298 = vst [vmem:[#allocation7] sm:$0xff] %v295
    %300 = vrot.lane.b32.xlu0 %v132, 112
    %v301 = vpop.permute.xlu0 %300
    %v302 = vsel %vm137, %v301, 0
    %v304 = vsel %vm137, %v132, 0
    %306 = vmatprep.subr.mxu0 0.0
    %307 = vmatpush1.xpose.msra.mxu0 0.0
    %308 = vmatprep.subr.mxu0 0.0
    %309 = vmatpush1.xpose.msra.mxu0 0.0
    %310 = vmatprep.subr.mxu0 0.0
    %311 = vmatpush1.xpose.msra.mxu0 0.0
    %312 = vmatprep.subr.mxu0 0.0
    %313 = vmatpush1.xpose.msra.mxu0 0.0
    %314 = vmatprep.subr.mxu0 0.0
    %315 = vmatpush1.xpose.msra.mxu0 0.0
    %316 = vmatprep.subr.mxu0 0.0
    %317 = vmatpush1.xpose.msra.mxu0 0.0
    %318 = vmatprep.subr.mxu0 0.0
    %319 = vmatpush1.xpose.msra.mxu0 0.0
    %320 = vmatprep.subr.mxu0 0.0
    %321 = vmatpush1.xpose.msra.mxu0 0.0
    %322 = vmatprep.subr.mxu0 0.0
    %323 = vmatpush1.xpose.msra.mxu0 0.0
    %324 = vmatprep.subr.mxu0 0.0
    %325 = vmatpush1.xpose.msra.mxu0 0.0
    %326 = vmatprep.subr.mxu0 0.0
    %327 = vmatpush1.xpose.msra.mxu0 0.0
    %328 = vmatprep.subr.mxu0 0.0
    %329 = vmatpush1.xpose.msra.mxu0 0.0
    %330 = vmatprep.subr.mxu0 0.0
    %331 = vmatpush1.xpose.msra.mxu0 0.0
    %332 = vmatprep.subr.mxu0 0.0
    %333 = vmatpush1.xpose.msra.mxu0 0.0
    %334 = vmatprep.subr.mxu0 0.0
    %335 = vmatpush1.xpose.msra.mxu0 0.0
    %336 = vmatprep.subr.mxu0 0.0
    %337 = vmatpush1.xpose.msra.mxu0 %v304
    %338 = vmatprep.subr.mxu0 0.0
    %339 = vmatpush2.xpose.msra.mxu0 0.0
    %340 = vmatprep.subr.mxu0 0.0
    %341 = vmatpush2.xpose.msra.mxu0 0.0
    %342 = vmatprep.subr.mxu0 0.0
    %343 = vmatpush2.xpose.msra.mxu0 0.0
    %344 = vmatprep.subr.mxu0 0.0
    %345 = vmatpush2.xpose.msra.mxu0 0.0
    %346 = vmatprep.subr.mxu0 0.0
    %347 = vmatpush2.xpose.msra.mxu0 0.0
    %348 = vmatprep.subr.mxu0 0.0
    %349 = vmatpush2.xpose.msra.mxu0 0.0
    %350 = vmatprep.subr.mxu0 0.0
    %351 = vmatpush2.xpose.msra.mxu0 0.0
    %352 = vmatprep.subr.mxu0 0.0
    %353 = vmatpush2.xpose.msra.mxu0 0.0
    %354 = vmatprep.subr.mxu0 0.0
    %355 = vmatpush2.xpose.msra.mxu0 0.0
    %356 = vmatprep.subr.mxu0 0.0
    %357 = vmatpush2.xpose.msra.mxu0 0.0
    %358 = vmatprep.subr.mxu0 0.0
    %359 = vmatpush2.xpose.msra.mxu0 0.0
    %360 = vmatprep.subr.mxu0 0.0
    %361 = vmatpush2.xpose.msra.mxu0 0.0
    %362 = vmatprep.subr.mxu0 0.0
    %363 = vmatpush2.xpose.msra.mxu0 0.0
    %364 = vmatprep.subr.mxu0 0.0
    %365 = vmatpush2.xpose.msra.mxu0 0.0
    %366 = vmatprep.subr.mxu0 0.0
    %367 = vmatpush2.xpose.msra.mxu0 0.0
    %368 = vmatprep.subr.mxu0 0.0
    %369 = vmatpush2.xpose.msra.mxu0 0.0
    %370 = vmatprep.mubr.f32.mxu0 0.0
    %371 = vmatmul.mubr.f32.gmra.mxu0 %v302
    %v372 = vpop.f32.mrf.mxu0
    %v373 = vadd.f32 0.0, %v372
    %v374 = vpop.f32.mrf.mxu0
    %375 = vdwg.mxu0
    %v376 = vmul.f32 %v373, 0.17677669
    %v377 = vsel %vm213, %v376, -inf
    %378 = vmax.xlane.f32.xlu0 %v377
    %v379 = vpop.xlane.xlu0 %378
    %v380 = vsub.f32 %v376, %v379
    %v381 = vmul.f32 %v380, 1.442695
    %v382 = vpow.pop %v381
    %v383 = vsel %vm213, %v382, 0.0
    %384 = vadd.xlane.f32.xlu0 %v383
    %v385 = vpop.xlane.xlu0 %384
    %v386 = vrcp.pop %v385
    %v387 = vmul.f32 %v382, %v386
    %v389 = vsel %vm213, %v387, 0
    %391 = vmatprep.subr.mxu0 0.0
    %392 = vmatpush1.msra.mxu0 0.0
    %393 = vmatprep.subr.mxu0 0.0
    %394 = vmatpush1.msra.mxu0 0.0
    %395 = vmatprep.subr.mxu0 0.0
    %396 = vmatpush1.msra.mxu0 0.0
    %397 = vmatprep.subr.mxu0 0.0
    %398 = vmatpush1.msra.mxu0 0.0
    %399 = vmatprep.subr.mxu0 0.0
    %400 = vmatpush1.msra.mxu0 0.0
    %401 = vmatprep.subr.mxu0 0.0
    %402 = vmatpush1.msra.mxu0 0.0
    %403 = vmatprep.subr.mxu0 0.0
    %404 = vmatpush1.msra.mxu0 0.0
    %405 = vmatprep.subr.mxu0 0.0
    %406 = vmatpush1.msra.mxu0 0.0
    %407 = vmatprep.subr.mxu0 0.0
    %408 = vmatpush1.msra.mxu0 0.0
    %409 = vmatprep.subr.mxu0 0.0
    %410 = vmatpush1.msra.mxu0 0.0
    %411 = vmatprep.subr.mxu0 0.0
    %412 = vmatpush1.msra.mxu0 0.0
    %413 = vmatprep.subr.mxu0 0.0
    %414 = vmatpush1.msra.mxu0 0.0
    %415 = vmatprep.subr.mxu0 0.0
    %416 = vmatpush1.msra.mxu0 0.0
    %417 = vmatprep.subr.mxu0 0.0
    %418 = vmatpush1.msra.mxu0 0.0
    %419 = vmatprep.subr.mxu0 0.0
    %420 = vmatpush1.msra.mxu0 0.0
    %421 = vmatprep.subr.mxu0 0.0
    %422 = vmatpush1.msra.mxu0 %v130
    %423 = vmatprep.subr.mxu0 0.0
    %424 = vmatpush2.msra.mxu0 0.0
    %425 = vmatprep.subr.mxu0 0.0
    %426 = vmatpush2.msra.mxu0 0.0
    %427 = vmatprep.subr.mxu0 0.0
    %428 = vmatpush2.msra.mxu0 0.0
    %429 = vmatprep.subr.mxu0 0.0
    %430 = vmatpush2.msra.mxu0 0.0
    %431 = vmatprep.subr.mxu0 0.0
    %432 = vmatpush2.msra.mxu0 0.0
    %433 = vmatprep.subr.mxu0 0.0
    %434 = vmatpush2.msra.mxu0 0.0
    %435 = vmatprep.subr.mxu0 0.0
    %436 = vmatpush2.msra.mxu0 0.0
    %437 = vmatprep.subr.mxu0 0.0
    %438 = vmatpush2.msra.mxu0 0.0
    %439 = vmatprep.subr.mxu0 0.0
    %440 = vmatpush2.msra.mxu0 0.0
    %441 = vmatprep.subr.mxu0 0.0
    %442 = vmatpush2.msra.mxu0 0.0
    %443 = vmatprep.subr.mxu0 0.0
    %444 = vmatpush2.msra.mxu0 0.0
    %445 = vmatprep.subr.mxu0 0.0
    %446 = vmatpush2.msra.mxu0 0.0
    %447 = vmatprep.subr.mxu0 0.0
    %448 = vmatpush2.msra.mxu0 0.0
    %449 = vmatprep.subr.mxu0 0.0
    %450 = vmatpush2.msra.mxu0 0.0
    %451 = vmatprep.subr.mxu0 0.0
    %452 = vmatpush2.msra.mxu0 0.0
    %453 = vmatprep.subr.mxu0 0.0
    %454 = vmatpush2.msra.mxu0 0.0
    %455 = vmatprep.mubr.f32.mxu0 0.0
    %456 = vmatmul.mubr.f32.gmra.mxu0 %v389
    %v457 = vpop.f32.mrf.mxu0
    %v458 = vadd.f32 0.0, %v457
    %v459 = vpop.f32.mrf.mxu0
    %460 = vdwg.mxu0
    %s461 = scalar_lea.vmem [#allocation7], 8
    %462 = vst [vmem:[%s461] sm:$0xff] %v458
    // Predicated region
    $region18: #{tpu_custom_call.1} parent=1 // pred_check
      _
    $region19: #{tpu_custom_call.1} parent=1 // pred_check_branch
      %464 = sbr.rel (0) target = $region21
    $region20: #{tpu_custom_call.1} parent=1 // pred_region
      %s466 = ssub.s32 256, 256
      %467 = vsyncadd [#allocation4], %s466
      %s468 = sshll.u32 [#allocation7], 4
      %s469 = int_to_ptr.vmem [resolvable:$true] %s468
      %474 = dma.vmem_to_hbm [thread:$0]  %s469, 256, %s2, [#allocation4], 128, 128, 8
    $region21: #{tpu_custom_call.1} parent=1 // pred_fallthru
      _
    // Predicated region
    $region22: #{tpu_custom_call.1} parent=1 // pred_check
      _
    $region23: #{tpu_custom_call.1} parent=1 // pred_check_branch
      %476 = sbr.rel (0) target = $region25
    $region24: #{tpu_custom_call.1} parent=1 // pred_region
      %477 = dma.done [#allocation4], 256
    $region25: #{tpu_custom_call.1} parent=1 // pred_fallthru
      _
    %478 = vsyncpa [#allocation3], 1
    %479 = vsyncpa [#allocation6], 1
    %480 = vsyncpa [#allocation4], 1

</llo_original>
